<compile_context>
chip_gen: v7x
topology: tpu7x:2x2x1
jax: 0.10.0
libtpu: 0.0.40
codegen_flags: <defaults>
</compile_context>

<pallas_src>
import jax
import jax.numpy as jnp
from jax.experimental import pallas as pl
from jax.experimental.pallas import tpu as pltpu

LANE = 128          # last-dim (lane) alignment
SUBLANE_BF16 = 16   # bf16 packs 2 rows/sublane -> 16-row dense M tiles
MAX_TILE_M = 128    # rows per grid step (activation tile); weights stay resident
# TODO(synk): on v6e/v7x, pad K/N to 256 (not 128) once hidden_features grows,
# to fill the 2x256x256 MXU; 128 already saturates v5e's 4x128x128 MXU.


def _round_up(n: int, m: int) -> int:
    return ((n + m - 1) // m) * m


def _mlp_fused_kernel(*refs):
    """Fused MLP body for one M tile.

    refs = (x_ref, w0_ref, ..., w_{L-1}_ref, o_ref)
    x and weights are bf16, zero-padded, lane-aligned. Each layer is a
    lane-dense MXU matmul with f32 accumulation; ReLU runs in f32 and the
    activation is narrowed to bf16 only immediately before the next dot.
    Intermediate activations never touch HBM.
    """
    x_ref = refs[0]
    w_refs = refs[1:-1]
    o_ref = refs[-1]

    h = x_ref[...]                                   # bf16 [TILE_M, Kp]
    for w_ref in w_refs[:-1]:
        acc = jnp.dot(h, w_ref[...], preferred_element_type=jnp.float32)
        h = jnp.maximum(acc, 0.0).astype(jnp.bfloat16)   # ReLU in f32, narrow last
    o_ref[...] = jnp.dot(
        h, w_refs[-1][...], preferred_element_type=jnp.float32
    ).astype(o_ref.dtype)


def mlp_fused_forward(x_padded, padded_weights_t, *, tile_m):
    """x_padded: [Mp, Kp] bf16 (Mp % tile_m == 0); weights: bf16 [Kp_l, Np_l]."""
    mp, kp = x_padded.shape
    np_out = padded_weights_t[-1].shape[1]
    grid = (mp // tile_m,)

    in_specs = [pl.BlockSpec((tile_m, kp), lambda i: (i, 0))]
    # Weight-stationary: full (tiny) weight block, same index every grid step.
    for w in padded_weights_t:
        in_specs.append(pl.BlockSpec(w.shape, lambda i: (0, 0)))
    out_specs = pl.BlockSpec((tile_m, np_out), lambda i: (i, 0))

    flops = 2 * mp * sum(w.shape[0] * w.shape[1] for w in padded_weights_t)
    bytes_accessed = (
        x_padded.size * x_padded.dtype.itemsize
        + sum(w.size * w.dtype.itemsize for w in padded_weights_t)
        + mp * np_out * 4
    )

    return pl.pallas_call(
        _mlp_fused_kernel,
        out_shape=jax.ShapeDtypeStruct((mp, np_out), jnp.float32),
        grid=grid,
        in_specs=in_specs,
        out_specs=out_specs,
        compiler_params=pltpu.CompilerParams(
            dimension_semantics=("parallel",)),   # 2x on v7x megacore; harmless v5e/v6e
        cost_estimate=pl.CostEstimate(
            flops=flops, transcendentals=0, bytes_accessed=bytes_accessed),
    )(x_padded, *padded_weights_t)
    # TODO(synk): for a steady-state serving loop, hide the ~100 KiB weight
    # HBM->VMEM DMA behind the previous step via a cross-call prefetch (P10).


class MLPPallas:
    """JAX/Pallas mirror of the PyTorch MLP module (bias-free linears)."""

    def __init__(self, in_features=64, hidden_features=32, n_hidden=1,
                 out_features=10, key=None):
        if key is None:
            key = jax.random.PRNGKey(42)
        keys = jax.random.split(key, n_hidden + 2)

        def init_linear(k, out_f, in_f):
            # Deterministic init (roughly Kaiming-uniform scale like nn.Linear).
            bound = 1.0 / float(in_f) ** 0.5
            return jax.random.uniform(
                k, (out_f, in_f), dtype=jnp.float32, minval=-bound, maxval=bound)

        self.in_features = in_features
        self.out_features = out_features

        # Raw PyTorch-layout f32 weights ([out_features, in_features]); kept
        # only for the pure-JAX reference check.
        self.raw_weights = [init_linear(keys[0], hidden_features, in_features)]
        self.raw_weights += [
            init_linear(keys[1 + i], hidden_features, hidden_features)
            for i in range(n_hidden)
        ]
        self.raw_weights.append(init_linear(keys[-1], out_features, hidden_features))

        # Lane-aligned (padded) feature widths per layer boundary.
        self.kp = _round_up(in_features, LANE)
        hp = _round_up(hidden_features, LANE)
        np_ = _round_up(out_features, LANE)
        padded_dims = [self.kp] + [hp] * (n_hidden + 1) + [np_]

        # Pre-transpose ([N,K] -> [K,N]), zero-pad, and cast to bf16 ONCE.
        pw = []
        for w, kd, nd in zip(self.raw_weights, padded_dims[:-1], padded_dims[1:]):
            wt = w.T  # [K, N]
            wt = jnp.pad(wt, ((0, kd - wt.shape[0]), (0, nd - wt.shape[1])))
            pw.append(wt.astype(jnp.bfloat16))
        self.padded_weights_t = tuple(pw)   # persistent device arrays (<1 MiB)

        # One jitted end-to-end forward: pad + kernel + slice in one dispatch.
        self._jit_forward = jax.jit(self._forward)

    def _forward(self, x, weights):
        B = x.shape[0]
        xf = x.reshape(B, -1)                       # torch.flatten(x, 1)
        m16 = _round_up(max(B, 1), SUBLANE_BF16)    # bf16-dense M padding
        tile_m = min(MAX_TILE_M, m16)
        mp = _round_up(m16, tile_m)
        xp = jnp.pad(
            xf.astype(jnp.float32),
            ((0, mp - B), (0, self.kp - xf.shape[1]))).astype(jnp.bfloat16)
        out = mlp_fused_forward(xp, weights, tile_m=tile_m)
        return out[:B, :self.out_features]

    def __call__(self, x):
        return self._jit_forward(x, self.padded_weights_t)


if __name__ == "__main__":
    key = jax.random.PRNGKey(0)
    k_x, k_params = jax.random.split(key)

    # Small shapes consistent with the module: B=2, C=4, H=W=4 -> in_features=64.
    x = jax.random.normal(k_x, (2, 4, 4, 4), dtype=jnp.float32)

    model = MLPPallas(in_features=4 * 4 * 4, hidden_features=32,
                      n_hidden=1, out_features=10, key=k_params)

    out = model(x)
    out = jax.block_until_ready(out)

    # Pure-JAX f32 reference of the same math (unpadded, PyTorch-layout weights).
    def ref_forward(x):
        h = x.reshape(x.shape[0], -1)
        h = jnp.maximum(h @ model.raw_weights[0].T, 0.0)
        for w in model.raw_weights[1:-1]:
            h = jnp.maximum(h @ w.T, 0.0)
        return h @ model.raw_weights[-1].T

    ref = ref_forward(x)
    assert out.shape == (2, 10), out.shape
    # bf16 weights/activations loosen the tolerance vs the f32 reference.
    assert jnp.allclose(out, ref, atol=3e-2, rtol=3e-2), "mismatch vs reference"

    print("KERNEL_OK")
</pallas_src>

<mosaic_0001>
module attributes {stable_mosaic.version = 11 : i64} {
  func.func @_mlp_fused_kernel(%arg0: i32, %arg1: memref<16x128xbf16, #tpu.memory_space<vmem>>, %arg2: memref<128x128xbf16, #tpu.memory_space<vmem>>, %arg3: memref<128x128xbf16, #tpu.memory_space<vmem>>, %arg4: memref<128x128xbf16, #tpu.memory_space<vmem>>, %arg5: memref<16x128xf32, #tpu.memory_space<vmem>>) attributes {dimension_semantics = [#tpu.dimension_semantics<parallel>], iteration_bounds = array<i64: 1>, scalar_prefetch = 0 : i64, scratch_operands = 0 : i64, tpu.core_type = #tpu.core_type<tc>, window_params = [{transform_indices = @transform_0, window_bounds = array<i64: 16, 128>}, {pipeline_mode = #tpu.pipeline_mode<synchronous>, transform_indices = @transform_1, window_bounds = array<i64: 128, 128>}, {pipeline_mode = #tpu.pipeline_mode<synchronous>, transform_indices = @transform_2, window_bounds = array<i64: 128, 128>}, {pipeline_mode = #tpu.pipeline_mode<synchronous>, transform_indices = @transform_3, window_bounds = array<i64: 128, 128>}, {transform_indices = @transform_4, window_bounds = array<i64: 16, 128>}]} {
    %c0 = arith.constant 0 : index
    %c0_0 = arith.constant 0 : index
    %0 = vector.load %arg1[%c0, %c0_0] : memref<16x128xbf16, #tpu.memory_space<vmem>>, vector<16x128xbf16>
    %c0_1 = arith.constant 0 : index
    %c0_2 = arith.constant 0 : index
    %1 = vector.load %arg2[%c0_1, %c0_2] : memref<128x128xbf16, #tpu.memory_space<vmem>>, vector<128x128xbf16>
    %cst = arith.constant dense<0.000000e+00> : vector<16x128xf32>
    %2 = tpu.matmul %0, %1, %cst {dimension_numbers = #tpu.dot_dimension_numbers<[1], [0], [0], [1], [0, 0, 1, 1], [], []>} : vector<16x128xbf16>, vector<128x128xbf16>, vector<16x128xf32> -> vector<16x128xf32>
    %cst_3 = arith.constant 0.000000e+00 : f32
    %3 = vector.broadcast %cst_3 : f32 to vector<16x128xf32>
    %4 = arith.maximumf %2, %3 : vector<16x128xf32>
    %5 = arith.truncf %4 : vector<16x128xf32> to vector<16x128xbf16>
    %c0_4 = arith.constant 0 : index
    %c0_5 = arith.constant 0 : index
    %6 = vector.load %arg3[%c0_4, %c0_5] : memref<128x128xbf16, #tpu.memory_space<vmem>>, vector<128x128xbf16>
    %cst_6 = arith.constant dense<0.000000e+00> : vector<16x128xf32>
    %7 = tpu.matmul %5, %6, %cst_6 {dimension_numbers = #tpu.dot_dimension_numbers<[1], [0], [0], [1], [0, 0, 1, 1], [], []>} : vector<16x128xbf16>, vector<128x128xbf16>, vector<16x128xf32> -> vector<16x128xf32>
    %cst_7 = arith.constant 0.000000e+00 : f32
    %8 = vector.broadcast %cst_7 : f32 to vector<16x128xf32>
    %9 = arith.maximumf %7, %8 : vector<16x128xf32>
    %10 = arith.truncf %9 : vector<16x128xf32> to vector<16x128xbf16>
    %c0_8 = arith.constant 0 : index
    %c0_9 = arith.constant 0 : index
    %11 = vector.load %arg4[%c0_8, %c0_9] : memref<128x128xbf16, #tpu.memory_space<vmem>>, vector<128x128xbf16>
    %cst_10 = arith.constant dense<0.000000e+00> : vector<16x128xf32>
    %12 = tpu.matmul %10, %11, %cst_10 {dimension_numbers = #tpu.dot_dimension_numbers<[1], [0], [0], [1], [0, 0, 1, 1], [], []>} : vector<16x128xbf16>, vector<128x128xbf16>, vector<16x128xf32> -> vector<16x128xf32>
    %c0_11 = arith.constant 0 : index
    %c0_12 = arith.constant 0 : index
    %13 = vector.load %arg5[%c0_11, %c0_12] : memref<16x128xf32, #tpu.memory_space<vmem>>, vector<16x128xf32>
    tpu.vector_store %arg5[%c0_11, %c0_12], %12 {strides = array<i32>} : memref<16x128xf32, #tpu.memory_space<vmem>>, vector<16x128xf32>,
    return
  }
  func.func @transform_0(%arg0: i32) -> (i32, i32) {
    %c0_i32 = arith.constant 0 : i32
    %c0_i32_0 = arith.constant 0 : i32
    return %arg0, %c0_i32 : i32, i32
  }
  func.func @transform_1(%arg0: i32) -> (i32, i32) {
    %c0_i32 = arith.constant 0 : i32
    %c0_i32_0 = arith.constant 0 : i32
    %c0_i32_1 = arith.constant 0 : i32
    return %c0_i32, %c0_i32_0 : i32, i32
  }
  func.func @transform_2(%arg0: i32) -> (i32, i32) {
    %c0_i32 = arith.constant 0 : i32
    %c0_i32_0 = arith.constant 0 : i32
    %c0_i32_1 = arith.constant 0 : i32
    return %c0_i32, %c0_i32_0 : i32, i32
  }
  func.func @transform_3(%arg0: i32) -> (i32, i32) {
    %c0_i32 = arith.constant 0 : i32
    %c0_i32_0 = arith.constant 0 : i32
    %c0_i32_1 = arith.constant 0 : i32
    return %c0_i32, %c0_i32_0 : i32, i32
  }
  func.func @transform_4(%arg0: i32) -> (i32, i32) {
    %c0_i32 = arith.constant 0 : i32
    %c0_i32_0 = arith.constant 0 : i32
    return %arg0, %c0_i32 : i32, i32
  }
}

</mosaic_0001>

<llo_original>
// kernel: _forward.1
$region0: #{_forward.1}
  #allocation0 [shape = 'u32[]', space=smem, size = 0x4, offset = 0x4, fixed_abs, tag = 'smem constant byte address 0x4 - core index']
  #allocation1 [shape = 'u32[144,128]{1,0:T(1,128)}', space=vmem, size = 0x12000, scoped, tag = 'internal scratch']
  %s0 = inlined_call_operand.vmem [shape: bf16[16,128], index: 0, kind: input, shape index: {}]
  %s1 = inlined_call_operand.vmem [shape: bf16[128,128], index: 1, kind: input, shape index: {}]
  %s2 = inlined_call_operand.hbm [shape: bf16[128,128], index: 2, kind: input, shape index: {}]
  %s3 = inlined_call_operand.hbm [shape: bf16[128,128], index: 3, kind: input, shape index: {}]
  %s4 = inlined_call_operand.vmem [shape: f32[16,128], index: 4, kind: output, shape index: {}]
  %s5 = sld [smem:[#allocation0]]
  $region34: #{_forward.1} parent=0
    _
  %s7 = ssub.s32 1, %s5
  %s8 = scalar_select 0, %s7, %s5
  $region1: #{_forward.1} parent=0
    #allocation2 [shape = 'u8[32768]{0}', space=vmem, size = 0x8000, scoped, tag = 'input window, operand 2, single buffered']
    #allocation3 [shape = 's32[1]{0}', space=sflag, size = 0x4, scoped, tag = 'scoped memory for _forward.1']
    #allocation4 [shape = 'u8[32768]{0}', space=vmem, size = 0x8000, scoped, tag = 'input window, operand 3, single buffered']
    #allocation5 [shape = 's32[1]{0}', space=sflag, size = 0x4, scoped, tag = 'scoped memory for _forward.1']
    %9 = vsyncpa [#allocation3], 0
    %10 = vsyncpa [#allocation5], 0
    // Predicated region
    $region2: #{_forward.1} parent=1 // pred_check
      _
    $region3: #{_forward.1} parent=1 // pred_check_branch
      %12 = sbr.rel (0) target = $region5
    $region4: #{_forward.1} parent=1 // pred_region
      _
    $region5: #{_forward.1} parent=1 // pred_fallthru
      _
    // Predicated region
    $region6: #{_forward.1} parent=1 // pred_check
      _
    $region7: #{_forward.1} parent=1 // pred_check_branch
      %14 = sbr.rel (0) target = $region9
    $region8: #{_forward.1} parent=1 // pred_region
      _
    $region9: #{_forward.1} parent=1 // pred_fallthru
      _
    // Predicated region
    $region10: #{_forward.1} parent=1 // pred_check
      _
    $region11: #{_forward.1} parent=1 // pred_check_branch
      %16 = sbr.rel (0) target = $region13
    $region12: #{_forward.1} parent=1 // pred_region
      %s18 = ssub.s32 1024, 1024
      %19 = vsyncadd [#allocation3], %s18
      %s20 = sshll.u32 [#allocation2], 4
      %s21 = int_to_ptr.vmem [resolvable:$true] %s20
      %26 = dma.hbm_to_vmem [thread:$0]  %s2, 1024, %s21, [#allocation3], 64, 64, 4
    $region13: #{_forward.1} parent=1 // pred_fallthru
      _
    // Predicated region
    $region14: #{_forward.1} parent=1 // pred_check
      _
    $region15: #{_forward.1} parent=1 // pred_check_branch
      %28 = sbr.rel (0) target = $region17
    $region16: #{_forward.1} parent=1 // pred_region
      %s30 = ssub.s32 1024, 1024
      %31 = vsyncadd [#allocation5], %s30
      %s32 = sshll.u32 [#allocation4], 4
      %s33 = int_to_ptr.vmem [resolvable:$true] %s32
      %38 = dma.hbm_to_vmem [thread:$0]  %s3, 1024, %s33, [#allocation5], 64, 64, 4
    $region17: #{_forward.1} parent=1 // pred_fallthru
      _
    // Predicated region
    $region18: #{_forward.1} parent=1 // pred_check
      _
    $region19: #{_forward.1} parent=1 // pred_check_branch
      %40 = sbr.rel (0) target = $region21
    $region20: #{_forward.1} parent=1 // pred_region
      %41 = dma.done [#allocation3], 1024
    $region21: #{_forward.1} parent=1 // pred_fallthru
      _
    // Predicated region
    $region22: #{_forward.1} parent=1 // pred_check
      _
    $region23: #{_forward.1} parent=1 // pred_check_branch
      %43 = sbr.rel (0) target = $region25
    $region24: #{_forward.1} parent=1 // pred_region
      %44 = dma.done [#allocation5], 1024
    $region25: #{_forward.1} parent=1 // pred_fallthru
      _
    %v46 = vld [vmem:[%s0] sm:$0xf]
    %v47 = vld [vmem:[%s0 + $0x4] sm:$0xf]
    %v48 = vld [vmem:[%s1] sm:$0xf]
    %v49 = vld [vmem:[%s1 + $0x4] sm:$0xf]
    %v50 = vld [vmem:[%s1 + $0x8] sm:$0xf]
    %v51 = vld [vmem:[%s1 + $0xc] sm:$0xf]
    %v52 = vld [vmem:[%s1 + $0x10] sm:$0xf]
    %v53 = vld [vmem:[%s1 + $0x14] sm:$0xf]
    %v54 = vld [vmem:[%s1 + $0x18] sm:$0xf]
    %v55 = vld [vmem:[%s1 + $0x1c] sm:$0xf]
    %v56 = vld [vmem:[%s1 + $0x20] sm:$0xf]
    %v57 = vld [vmem:[%s1 + $0x24] sm:$0xf]
    %v58 = vld [vmem:[%s1 + $0x28] sm:$0xf]
    %v59 = vld [vmem:[%s1 + $0x2c] sm:$0xf]
    %v60 = vld [vmem:[%s1 + $0x30] sm:$0xf]
    %v61 = vld [vmem:[%s1 + $0x34] sm:$0xf]
    %v62 = vld [vmem:[%s1 + $0x38] sm:$0xf]
    %v63 = vld [vmem:[%s1 + $0x3c] sm:$0xf]
    %v66 = vunpack.c.l.b16 %v46
    %v67 = vunpack.c.l.b16 %v47
    %v68 = vpack.c.b16 %v67, %v66
    %v86 = vunpack.c.l.b16 %v48
    %v87 = vunpack.c.l.b16 %v49
    %v88 = vunpack.c.l.b16 %v50
    %v89 = vunpack.c.l.b16 %v51
    %v90 = vunpack.c.l.b16 %v52
    %v91 = vunpack.c.l.b16 %v53
    %v92 = vunpack.c.l.b16 %v54
    %v93 = vunpack.c.l.b16 %v55
    %v94 = vunpack.c.l.b16 %v56
    %v95 = vunpack.c.l.b16 %v57
    %v96 = vunpack.c.l.b16 %v58
    %v97 = vunpack.c.l.b16 %v59
    %v98 = vunpack.c.l.b16 %v60
    %v99 = vunpack.c.l.b16 %v61
    %v100 = vunpack.c.l.b16 %v62
    %v101 = vunpack.c.l.b16 %v63
    %v102 = vpack.c.b16 %v87, %v86
    %v103 = vpack.c.b16 %v89, %v88
    %v104 = vpack.c.b16 %v91, %v90
    %v105 = vpack.c.b16 %v93, %v92
    %v106 = vpack.c.b16 %v95, %v94
    %v107 = vpack.c.b16 %v97, %v96
    %v108 = vpack.c.b16 %v99, %v98
    %v109 = vpack.c.b16 %v101, %v100
    %118 = vmatprep.subr.bf16.mxu0 0
    %119 = vmatpush1.bf16.msra.mxu0 %v102
    %120 = vmatprep.subr.bf16.mxu0 0
    %121 = vmatpush1.bf16.msra.mxu0 %v103
    %122 = vmatprep.subr.bf16.mxu0 0
    %123 = vmatpush1.bf16.msra.mxu0 %v104
    %124 = vmatprep.subr.bf16.mxu0 0
    %125 = vmatpush1.bf16.msra.mxu0 %v105
    %126 = vmatprep.subr.bf16.mxu0 0
    %127 = vmatpush1.bf16.msra.mxu0 %v106
    %128 = vmatprep.subr.bf16.mxu0 0
    %129 = vmatpush1.bf16.msra.mxu0 %v107
    %130 = vmatprep.subr.bf16.mxu0 0
    %131 = vmatpush1.bf16.msra.mxu0 %v108
    %132 = vmatprep.subr.bf16.mxu0 0
    %133 = vmatpush1.bf16.msra.mxu0 %v109
    %134 = vmatprep.subr.bf16.mxu0 0
    %135 = vmatpush1.bf16.msra.mxu0 0
    %136 = vmatprep.subr.bf16.mxu0 0
    %137 = vmatpush1.bf16.msra.mxu0 0
    %138 = vmatprep.subr.bf16.mxu0 0
    %139 = vmatpush1.bf16.msra.mxu0 0
    %140 = vmatprep.subr.bf16.mxu0 0
    %141 = vmatpush1.bf16.msra.mxu0 0
    %142 = vmatprep.subr.bf16.mxu0 0
    %143 = vmatpush1.bf16.msra.mxu0 0
    %144 = vmatprep.subr.bf16.mxu0 0
    %145 = vmatpush1.bf16.msra.mxu0 0
    %146 = vmatprep.subr.bf16.mxu0 0
    %147 = vmatpush1.bf16.msra.mxu0 0
    %148 = vmatprep.subr.bf16.mxu0 0
    %149 = vmatpush1.bf16.msra.mxu0 0
    %150 = vmatprep.mubr.bf16.mxu0 0
    %151 = vmatmul.mubr.bf16.gmra.mrb[0].mxu0 %v68
    %v152 = vpop.f32.mrb[0].mxu0
    %v153 = vadd.f32 0.0, %v152
    %v154 = vpop.f32.mrb[0].mxu0
    %v155 = vpop.f32.mrb[0].mxu0
    %v156 = vadd.f32 0.0, %v155
    %v157 = vpop.f32.mrb[0].mxu0
    %158 = vdwg.mxu0
    %v159 = vmax.f32 %v153, 0.0
    %v160 = vmax.f32 %v156, 0.0
    %v161 = vpack.c.bf16 %v160, %v159
    %v162 = vld [vmem:[#allocation2] sm:$0xf]
    %v163 = vld [vmem:[#allocation2 + $0x4] sm:$0xf]
    %v164 = vld [vmem:[#allocation2 + $0x8] sm:$0xf]
    %v165 = vld [vmem:[#allocation2 + $0xc] sm:$0xf]
    %v166 = vld [vmem:[#allocation2 + $0x10] sm:$0xf]
    %v167 = vld [vmem:[#allocation2 + $0x14] sm:$0xf]
    %v168 = vld [vmem:[#allocation2 + $0x18] sm:$0xf]
    %v169 = vld [vmem:[#allocation2 + $0x1c] sm:$0xf]
    %v170 = vld [vmem:[#allocation2 + $0x20] sm:$0xf]
    %v171 = vld [vmem:[#allocation2 + $0x24] sm:$0xf]
    %v172 = vld [vmem:[#allocation2 + $0x28] sm:$0xf]
    %v173 = vld [vmem:[#allocation2 + $0x2c] sm:$0xf]
    %v174 = vld [vmem:[#allocation2 + $0x30] sm:$0xf]
    %v175 = vld [vmem:[#allocation2 + $0x34] sm:$0xf]
    %v176 = vld [vmem:[#allocation2 + $0x38] sm:$0xf]
    %v177 = vld [vmem:[#allocation2 + $0x3c] sm:$0xf]
    %v194 = vunpack.c.l.b16 %v162
    %v195 = vunpack.c.l.b16 %v163
    %v196 = vunpack.c.l.b16 %v164
    %v197 = vunpack.c.l.b16 %v165
    %v198 = vunpack.c.l.b16 %v166
    %v199 = vunpack.c.l.b16 %v167
    %v200 = vunpack.c.l.b16 %v168
    %v201 = vunpack.c.l.b16 %v169
    %v202 = vunpack.c.l.b16 %v170
    %v203 = vunpack.c.l.b16 %v171
    %v204 = vunpack.c.l.b16 %v172
    %v205 = vunpack.c.l.b16 %v173
    %v206 = vunpack.c.l.b16 %v174
    %v207 = vunpack.c.l.b16 %v175
    %v208 = vunpack.c.l.b16 %v176
    %v209 = vunpack.c.l.b16 %v177
    %v210 = vpack.c.b16 %v195, %v194
    %v211 = vpack.c.b16 %v197, %v196
    %v212 = vpack.c.b16 %v199, %v198
    %v213 = vpack.c.b16 %v201, %v200
    %v214 = vpack.c.b16 %v203, %v202
    %v215 = vpack.c.b16 %v205, %v204
    %v216 = vpack.c.b16 %v207, %v206
    %v217 = vpack.c.b16 %v209, %v208
    %226 = vmatprep.subr.bf16.mxu0 0
    %227 = vmatpush1.bf16.msra.mxu0 %v210
    %228 = vmatprep.subr.bf16.mxu0 0
    %229 = vmatpush1.bf16.msra.mxu0 %v211
    %230 = vmatprep.subr.bf16.mxu0 0
    %231 = vmatpush1.bf16.msra.mxu0 %v212
    %232 = vmatprep.subr.bf16.mxu0 0
    %233 = vmatpush1.bf16.msra.mxu0 %v213
    %234 = vmatprep.subr.bf16.mxu0 0
    %235 = vmatpush1.bf16.msra.mxu0 %v214
    %236 = vmatprep.subr.bf16.mxu0 0
    %237 = vmatpush1.bf16.msra.mxu0 %v215
    %238 = vmatprep.subr.bf16.mxu0 0
    %239 = vmatpush1.bf16.msra.mxu0 %v216
    %240 = vmatprep.subr.bf16.mxu0 0
    %241 = vmatpush1.bf16.msra.mxu0 %v217
    %242 = vmatprep.subr.bf16.mxu0 0
    %243 = vmatpush1.bf16.msra.mxu0 0
    %244 = vmatprep.subr.bf16.mxu0 0
    %245 = vmatpush1.bf16.msra.mxu0 0
    %246 = vmatprep.subr.bf16.mxu0 0
    %247 = vmatpush1.bf16.msra.mxu0 0
    %248 = vmatprep.subr.bf16.mxu0 0
    %249 = vmatpush1.bf16.msra.mxu0 0
    %250 = vmatprep.subr.bf16.mxu0 0
    %251 = vmatpush1.bf16.msra.mxu0 0
    %252 = vmatprep.subr.bf16.mxu0 0
    %253 = vmatpush1.bf16.msra.mxu0 0
    %254 = vmatprep.subr.bf16.mxu0 0
    %255 = vmatpush1.bf16.msra.mxu0 0
    %256 = vmatprep.subr.bf16.mxu0 0
    %257 = vmatpush1.bf16.msra.mxu0 0
    %258 = vmatprep.mubr.bf16.mxu0 0
    %259 = vmatmul.mubr.bf16.gmra.mrb[0].mxu0 %v161
    %v260 = vpop.f32.mrb[0].mxu0
    %v261 = vadd.f32 0.0, %v260
    %v262 = vpop.f32.mrb[0].mxu0
    %v263 = vpop.f32.mrb[0].mxu0
    %v264 = vadd.f32 0.0, %v263
    %v265 = vpop.f32.mrb[0].mxu0
    %266 = vdwg.mxu0
    %v267 = vmax.f32 %v261, 0.0
    %v268 = vmax.f32 %v264, 0.0
    %v269 = vpack.c.bf16 %v268, %v267
    %v270 = vld [vmem:[#allocation4] sm:$0xf]
    %v271 = vld [vmem:[#allocation4 + $0x4] sm:$0xf]
    %v272 = vld [vmem:[#allocation4 + $0x8] sm:$0xf]
    %v273 = vld [vmem:[#allocation4 + $0xc] sm:$0xf]
    %v274 = vld [vmem:[#allocation4 + $0x10] sm:$0xf]
    %v275 = vld [vmem:[#allocation4 + $0x14] sm:$0xf]
    %v276 = vld [vmem:[#allocation4 + $0x18] sm:$0xf]
    %v277 = vld [vmem:[#allocation4 + $0x1c] sm:$0xf]
    %v278 = vld [vmem:[#allocation4 + $0x20] sm:$0xf]
    %v279 = vld [vmem:[#allocation4 + $0x24] sm:$0xf]
    %v280 = vld [vmem:[#allocation4 + $0x28] sm:$0xf]
    %v281 = vld [vmem:[#allocation4 + $0x2c] sm:$0xf]
    %v282 = vld [vmem:[#allocation4 + $0x30] sm:$0xf]
    %v283 = vld [vmem:[#allocation4 + $0x34] sm:$0xf]
    %v284 = vld [vmem:[#allocation4 + $0x38] sm:$0xf]
    %v285 = vld [vmem:[#allocation4 + $0x3c] sm:$0xf]
    %v302 = vunpack.c.l.b16 %v270
    %v303 = vunpack.c.l.b16 %v271
    %v304 = vunpack.c.l.b16 %v272
    %v305 = vunpack.c.l.b16 %v273
    %v306 = vunpack.c.l.b16 %v274
    %v307 = vunpack.c.l.b16 %v275
    %v308 = vunpack.c.l.b16 %v276
    %v309 = vunpack.c.l.b16 %v277
    %v310 = vunpack.c.l.b16 %v278
    %v311 = vunpack.c.l.b16 %v279
    %v312 = vunpack.c.l.b16 %v280
    %v313 = vunpack.c.l.b16 %v281
    %v314 = vunpack.c.l.b16 %v282
    %v315 = vunpack.c.l.b16 %v283
    %v316 = vunpack.c.l.b16 %v284
    %v317 = vunpack.c.l.b16 %v285
    %v318 = vpack.c.b16 %v303, %v302
    %v319 = vpack.c.b16 %v305, %v304
    %v320 = vpack.c.b16 %v307, %v306
    %v321 = vpack.c.b16 %v309, %v308
    %v322 = vpack.c.b16 %v311, %v310
    %v323 = vpack.c.b16 %v313, %v312
    %v324 = vpack.c.b16 %v315, %v314
    %v325 = vpack.c.b16 %v317, %v316
    %334 = vmatprep.subr.bf16.mxu0 0
    %335 = vmatpush1.bf16.msra.mxu0 %v318
    %336 = vmatprep.subr.bf16.mxu0 0
    %337 = vmatpush1.bf16.msra.mxu0 %v319
    %338 = vmatprep.subr.bf16.mxu0 0
    %339 = vmatpush1.bf16.msra.mxu0 %v320
    %340 = vmatprep.subr.bf16.mxu0 0
    %341 = vmatpush1.bf16.msra.mxu0 %v321
    %342 = vmatprep.subr.bf16.mxu0 0
    %343 = vmatpush1.bf16.msra.mxu0 %v322
    %344 = vmatprep.subr.bf16.mxu0 0
    %345 = vmatpush1.bf16.msra.mxu0 %v323
    %346 = vmatprep.subr.bf16.mxu0 0
    %347 = vmatpush1.bf16.msra.mxu0 %v324
    %348 = vmatprep.subr.bf16.mxu0 0
    %349 = vmatpush1.bf16.msra.mxu0 %v325
    %350 = vmatprep.subr.bf16.mxu0 0
    %351 = vmatpush1.bf16.msra.mxu0 0
    %352 = vmatprep.subr.bf16.mxu0 0
    %353 = vmatpush1.bf16.msra.mxu0 0
    %354 = vmatprep.subr.bf16.mxu0 0
    %355 = vmatpush1.bf16.msra.mxu0 0
    %356 = vmatprep.subr.bf16.mxu0 0
    %357 = vmatpush1.bf16.msra.mxu0 0
    %358 = vmatprep.subr.bf16.mxu0 0
    %359 = vmatpush1.bf16.msra.mxu0 0
    %360 = vmatprep.subr.bf16.mxu0 0
    %361 = vmatpush1.bf16.msra.mxu0 0
    %362 = vmatprep.subr.bf16.mxu0 0
    %363 = vmatpush1.bf16.msra.mxu0 0
    %364 = vmatprep.subr.bf16.mxu0 0
    %365 = vmatpush1.bf16.msra.mxu0 0
    %366 = vmatprep.mubr.bf16.mxu0 0
    %367 = vmatmul.mubr.bf16.gmra.mrb[0].mxu0 %v269
    %v368 = vpop.f32.mrb[0].mxu0
    %v369 = vadd.f32 0.0, %v368
    %v370 = vpop.f32.mrb[0].mxu0
    %v371 = vpop.f32.mrb[0].mxu0
    %v372 = vadd.f32 0.0, %v371
    %v373 = vpop.f32.mrb[0].mxu0
    %374 = vdwg.mxu0
    %375 = vst [vmem:[%s4] sm:$0xff] %v369
    %376 = vst [vmem:[%s4 + $0x8] sm:$0xff] %v372
    // Predicated region
    $region26: #{_forward.1} parent=1 // pred_check
      _
    $region27: #{_forward.1} parent=1 // pred_check_branch
      %378 = sbr.rel (0) target = $region29
    $region28: #{_forward.1} parent=1 // pred_region
      _
    $region29: #{_forward.1} parent=1 // pred_fallthru
      _
    // Predicated region
    $region30: #{_forward.1} parent=1 // pred_check
      _
    $region31: #{_forward.1} parent=1 // pred_check_branch
      %380 = sbr.rel (0) target = $region33
    $region32: #{_forward.1} parent=1 // pred_region
      _
    $region33: #{_forward.1} parent=1 // pred_fallthru
      _
    %381 = vsyncpa [#allocation3], 1
    %382 = vsyncpa [#allocation5], 1

</llo_original>
